<compile_context>
chip_gen: v7x
topology: tpu7x:2x2x1
jax: 0.10.0
libtpu: 0.0.40
codegen_flags: <defaults>
</compile_context>

<pallas_src>
import math
import functools

import numpy as np
import jax
import jax.numpy as jnp
from jax import lax
from jax.experimental import pallas as pl
from jax.experimental.pallas import tpu as pltpu

INF = 10000.0


# ---------------------------------------------------------------------------
# Kernel 1: projections (split i_dense) + swish + q/k ScaleOffset (+ folded
#           attention scales).
# ---------------------------------------------------------------------------
def _proj_kernel(h_ref, wu_ref, wv_ref, wqk_ref, gq_ref, bq_ref, gk_ref,
                 bk_ref, u_ref, v_ref, q_ref, k_ref, *, qk_scale):
    h = h_ref[0].astype(jnp.bfloat16)                              # [ts, H]

    u = jnp.dot(h, wu_ref[...], preferred_element_type=jnp.float32)
    u = u * jax.nn.sigmoid(u)                                      # swish (f32)
    v = jnp.dot(h, wv_ref[...], preferred_element_type=jnp.float32)
    v = v * jax.nn.sigmoid(v)
    qk = jnp.dot(h, wqk_ref[...], preferred_element_type=jnp.float32)
    qk = qk * jax.nn.sigmoid(qk)

    # ScaleOffset; 1/sqrt(K) and log(S)/log(512) folded into q ([ts,K] work,
    # not [S,S]).
    q = (qk * gq_ref[...] + bq_ref[...]) * qk_scale
    k = qk * gk_ref[...] + bk_ref[...]

    u_ref[0] = u.astype(u_ref.dtype)
    v_ref[0] = v.astype(v_ref.dtype)
    q_ref[0] = q.astype(q_ref.dtype)
    k_ref[0] = k.astype(k_ref.dtype)


# ---------------------------------------------------------------------------
# Kernel 2: flash-style attention (full-row softmax_plus, post-softmax causal
#           -INF handled via a future-v suffix sum) + gate + o_dense +
#           residual + RMSNorm(bias=True).
# ---------------------------------------------------------------------------
def _attn_kernel(q_ref, k_ref, v_ref, u_ref, h_ref, wo_ref, rs_ref, ro_ref,
                 out_ref, m_sc, l_sc, acc_sc, suf_sc,
                 *, tq, tk, H, alpha, eps):
    qi = pl.program_id(1)
    ki = pl.program_id(2)

    @pl.when(ki == 0)
    def _():
        m_sc[...] = jnp.full(m_sc.shape, -jnp.inf, jnp.float32)
        l_sc[...] = jnp.zeros(l_sc.shape, jnp.float32)
        acc_sc[...] = jnp.zeros(acc_sc.shape, jnp.float32)
        suf_sc[...] = jnp.zeros(suf_sc.shape, jnp.float32)

    # Scores: contract last dims of q and k directly (no k.T materialization).
    s = lax.dot_general(q_ref[0], k_ref[0], (((1,), (1,)), ((), ())),
                        preferred_element_type=jnp.float32)       # [tq, tk]

    # Online softmax over the FULL row (the module normalizes before masking).
    m_prev = m_sc[...]
    m_new = jnp.maximum(m_prev, jnp.max(s, axis=-1, keepdims=True))
    corr = jnp.exp(m_prev - m_new)
    p = jnp.exp(s - m_new)
    l_sc[...] = corr * l_sc[...] + jnp.sum(p, axis=-1, keepdims=True)
    m_sc[...] = m_new

    # Per-tile causal visibility (tq x tk, never S x S).
    row = qi * tq + lax.broadcasted_iota(jnp.int32, (tq, tk), 0)
    col = ki * tk + lax.broadcasted_iota(jnp.int32, (tq, tk), 1)
    vis = (col <= row).astype(jnp.float32)

    v = v_ref[0]                                                  # bf16 [tk,I]
    acc_sc[...] = corr * acc_sc[...] + jnp.dot(
        (p * vis).astype(jnp.bfloat16), v, preferred_element_type=jnp.float32)
    # Future positions of A are overwritten with -INF after softmax in the
    # module, so their contribution is (-INF) * sum_{n>m} v[n]; accumulate the
    # suffix exactly here (kept in f32, -INF applied once at finalize).
    suf_sc[...] = suf_sc[...] + jnp.dot(
        (1.0 - vis).astype(jnp.bfloat16), v, preferred_element_type=jnp.float32)

    @pl.when(ki == pl.num_programs(2) - 1)
    def _():
        inv_l = pl.reciprocal(l_sc[...], approx=True)             # EUP
        av = acc_sc[...] * inv_l - INF * suf_sc[...]              # [tq, I] f32
        gate = (u_ref[0].astype(jnp.float32) * av).astype(jnp.bfloat16)
        gau = jnp.dot(gate, wo_ref[...],
                      preferred_element_type=jnp.float32)         # [tq, H]
        res = gau * alpha + h_ref[0]                              # residual
        rms = jnp.sqrt(jnp.sum(res * res, axis=-1, keepdims=True)) * (H ** -0.5)
        inv = pl.reciprocal(rms + eps, approx=True)               # EUP
        out = rs_ref[...] * (res * inv) + ro_ref[...]
        out_ref[0] = out.astype(out_ref.dtype)


def _pick_tile(n, pref=256):
    if n <= pref:
        return n
    for t in (pref, 128, 64, 32, 16, 8):
        if n % t == 0:
            return t
    return n


def gau_layer_forward(h, wi, wo, gq, bq, gk, bk, rms_scale, rms_off,
                      *, alpha, eps):
    B, S, H = h.shape
    I = wo.shape[0]
    K = wi.shape[1] - 2 * I

    ts = _pick_tile(S)
    tq = _pick_tile(S)
    tk = _pick_tile(S)
    assert S % ts == 0 and S % tq == 0 and S % tk == 0

    # Split fused i_dense weight; cast MXU operands to bf16 once (wrapper).
    wu = wi[:, :I].astype(jnp.bfloat16)
    wv = wi[:, I:2 * I].astype(jnp.bfloat16)
    wqk = wi[:, 2 * I:].astype(jnp.bfloat16)
    wo_b = wo.astype(jnp.bfloat16)

    plus_scale = math.log(S) / math.log(512.0)     # softmax_plus, mask is None
    qk_scale = np.float32(plus_scale / math.sqrt(K))

    # ---- Kernel 1: projections ---------------------------------------------
    u, v, q, k = pl.pallas_call(
        functools.partial(_proj_kernel, qk_scale=qk_scale),
        out_shape=(
            jax.ShapeDtypeStruct((B, S, I), jnp.bfloat16),   # u
            jax.ShapeDtypeStruct((B, S, I), jnp.bfloat16),   # v
            jax.ShapeDtypeStruct((B, S, K), jnp.bfloat16),   # q (pre-scaled)
            jax.ShapeDtypeStruct((B, S, K), jnp.bfloat16),   # k
        ),
        grid_spec=pltpu.PrefetchScalarGridSpec(
            num_scalar_prefetch=0,
            grid=(B, S // ts),
            in_specs=[
                pl.BlockSpec((1, ts, H), lambda b, si: (b, si, 0)),  # h
                pl.BlockSpec((H, I), lambda b, si: (0, 0)),          # Wu
                pl.BlockSpec((H, I), lambda b, si: (0, 0)),          # Wv
                pl.BlockSpec((H, K), lambda b, si: (0, 0)),          # Wqk
                pl.BlockSpec((1, K), lambda b, si: (0, 0)),          # q gamma
                pl.BlockSpec((1, K), lambda b, si: (0, 0)),          # q beta
                pl.BlockSpec((1, K), lambda b, si: (0, 0)),          # k gamma
                pl.BlockSpec((1, K), lambda b, si: (0, 0)),          # k beta
            ],
            out_specs=[
                pl.BlockSpec((1, ts, I), lambda b, si: (b, si, 0)),
                pl.BlockSpec((1, ts, I), lambda b, si: (b, si, 0)),
                pl.BlockSpec((1, ts, K), lambda b, si: (b, si, 0)),
                pl.BlockSpec((1, ts, K), lambda b, si: (b, si, 0)),
            ]),
        compiler_params=pltpu.CompilerParams(
            dimension_semantics=("parallel", "parallel"),
            vmem_limit_bytes=64 * 1024 * 1024),
    )(h, wu, wv, wqk, gq, bq, gk, bk)

    # ---- Kernel 2: attention + gate + o_dense + residual + RMSNorm ---------
    out = pl.pallas_call(
        functools.partial(_attn_kernel, tq=tq, tk=tk, H=H,
                          alpha=float(alpha), eps=float(eps)),
        out_shape=jax.ShapeDtypeStruct((B, S, H), h.dtype),
        grid_spec=pltpu.PrefetchScalarGridSpec(
            num_scalar_prefetch=0,
            grid=(B, S // tq, S // tk),
            in_specs=[
                pl.BlockSpec((1, tq, K), lambda b, qi, ki: (b, qi, 0)),  # q
                pl.BlockSpec((1, tk, K), lambda b, qi, ki: (b, ki, 0)),  # k
                pl.BlockSpec((1, tk, I), lambda b, qi, ki: (b, ki, 0)),  # v
                pl.BlockSpec((1, tq, I), lambda b, qi, ki: (b, qi, 0)),  # u
                pl.BlockSpec((1, tq, H), lambda b, qi, ki: (b, qi, 0)),  # h res
                pl.BlockSpec((I, H), lambda b, qi, ki: (0, 0)),          # Wo
                pl.BlockSpec((1, H), lambda b, qi, ki: (0, 0)),          # rms s
                pl.BlockSpec((1, H), lambda b, qi, ki: (0, 0)),          # rms o
            ],
            out_specs=pl.BlockSpec((1, tq, H), lambda b, qi, ki: (b, qi, 0)),
            scratch_shapes=[
                pltpu.VMEM((tq, 1), jnp.float32),   # running row max
                pltpu.VMEM((tq, 1), jnp.float32),   # running denominator
                pltpu.VMEM((tq, I), jnp.float32),   # masked p@v accumulator
                pltpu.VMEM((tq, I), jnp.float32),   # future-v suffix sum
            ]),
        compiler_params=pltpu.CompilerParams(
            dimension_semantics=("parallel", "parallel", "arbitrary"),
            vmem_limit_bytes=64 * 1024 * 1024),
    )(q, k, v, u, h, wo_b, rms_scale, rms_off)

    return out


def gau_layer_reference(h, wi, wo, gq, bq, gk, bk, rms_scale, rms_off,
                        *, alpha, eps):
    """Pure-JAX f32 reference mirroring the PyTorch forward (eval mode)."""
    B, S, H = h.shape
    I = wo.shape[0]
    K = wi.shape[1] - 2 * I

    x = jnp.einsum('bsh,hd->bsd', h, wi)
    x = x * jax.nn.sigmoid(x)
    u, v, qk = x[..., :I], x[..., I:2 * I], x[..., 2 * I:]
    q = qk * gq[0] + bq[0]
    k = qk * gk[0] + bk[0]
    a = jnp.einsum('bmd,bnd->bmn', q, k) / math.sqrt(K)
    scale = math.log(S) / math.log(512.0)
    A = jax.nn.softmax(a * scale, axis=-1)
    causal = jnp.triu(jnp.ones((S, S), dtype=bool), 1)
    A = jnp.where(causal[None], -INF, A)
    gau_out = jnp.einsum('bsi,ih->bsh', u * jnp.einsum('bmn,bni->bmi', A, v), wo)
    res = gau_out * alpha + h
    norm_x = jnp.linalg.norm(res, axis=-1, keepdims=True)
    rms_x = norm_x * (H ** -0.5)
    x_normed = res / (rms_x + eps)
    return rms_scale[0] * x_normed + rms_off[0]


if __name__ == "__main__":
    # Small config: hidden=32, intermediate=64, key=32, seq=8, batch=2
    B, S, H, I, K = 2, 8, 32, 64, 32
    alpha = 1.0          # config.deepnorm = False
    eps = 1e-8

    key = jax.random.PRNGKey(0)
    ks = jax.random.split(key, 9)

    h = jax.random.normal(ks[0], (B, S, H), dtype=jnp.float32)
    wi = 0.02 * jax.random.normal(ks[1], (H, 2 * I + K), dtype=jnp.float32)
    wo = 0.02 * jax.random.normal(ks[2], (I, H), dtype=jnp.float32)
    # Perturb ScaleOffset / RMSNorm params away from their (1, 0) init so the
    # affine paths are actually exercised.
    gq = 1.0 + 0.1 * jax.random.normal(ks[3], (1, K), dtype=jnp.float32)
    bq = 0.05 * jax.random.normal(ks[4], (1, K), dtype=jnp.float32)
    gk = 1.0 + 0.1 * jax.random.normal(ks[5], (1, K), dtype=jnp.float32)
    bk = 0.05 * jax.random.normal(ks[6], (1, K), dtype=jnp.float32)
    rms_scale = 1.0 + 0.1 * jax.random.normal(ks[7], (1, H), dtype=jnp.float32)
    rms_off = 0.05 * jax.random.normal(ks[8], (1, H), dtype=jnp.float32)

    out = gau_layer_forward(h, wi, wo, gq, bq, gk, bk, rms_scale, rms_off,
                            alpha=alpha, eps=eps)
    out = jax.block_until_ready(out)

    ref = gau_layer_reference(h, wi, wo, gq, bq, gk, bk, rms_scale, rms_off,
                              alpha=alpha, eps=eps)
    # Tolerance accounts for bf16 MXU operands + approx EUP reciprocals in the
    # kernel vs the exact-f32 reference (the post-softmax -INF fill amplifies
    # absolute magnitudes before the RMSNorm renormalizes them).
    np.testing.assert_allclose(np.asarray(out), np.asarray(ref),
                               rtol=5e-2, atol=5e-2)
    print("KERNEL_OK")
</pallas_src>

<mosaic_0001>
module attributes {stable_mosaic.version = 11 : i64} {
  func.func @_proj_kernel(%arg0: i32, %arg1: i32, %arg2: memref<1x8x32xf32, #tpu.memory_space<vmem>>, %arg3: memref<32x64xbf16, #tpu.memory_space<vmem>>, %arg4: memref<32x64xbf16, #tpu.memory_space<vmem>>, %arg5: memref<32x32xbf16, #tpu.memory_space<vmem>>, %arg6: memref<1x32xf32, #tpu.memory_space<vmem>>, %arg7: memref<1x32xf32, #tpu.memory_space<vmem>>, %arg8: memref<1x32xf32, #tpu.memory_space<vmem>>, %arg9: memref<1x32xf32, #tpu.memory_space<vmem>>, %arg10: memref<1x8x64xbf16, #tpu.memory_space<vmem>>, %arg11: memref<1x8x64xbf16, #tpu.memory_space<vmem>>, %arg12: memref<1x8x32xbf16, #tpu.memory_space<vmem>>, %arg13: memref<1x8x32xbf16, #tpu.memory_space<vmem>>) attributes {dimension_semantics = [#tpu.dimension_semantics<parallel>, #tpu.dimension_semantics<parallel>], iteration_bounds = array<i64: 2, 1>, scalar_prefetch = 0 : i64, scratch_operands = 0 : i64, tpu.core_type = #tpu.core_type<tc>, window_params = [{transform_indices = @transform_0, window_bounds = array<i64: 1, 8, 32>}, {pipeline_mode = #tpu.pipeline_mode<synchronous>, transform_indices = @transform_1, window_bounds = array<i64: 32, 64>}, {pipeline_mode = #tpu.pipeline_mode<synchronous>, transform_indices = @transform_2, window_bounds = array<i64: 32, 64>}, {pipeline_mode = #tpu.pipeline_mode<synchronous>, transform_indices = @transform_3, window_bounds = array<i64: 32, 32>}, {pipeline_mode = #tpu.pipeline_mode<synchronous>, transform_indices = @transform_4, window_bounds = array<i64: 1, 32>}, {pipeline_mode = #tpu.pipeline_mode<synchronous>, transform_indices = @transform_5, window_bounds = array<i64: 1, 32>}, {pipeline_mode = #tpu.pipeline_mode<synchronous>, transform_indices = @transform_6, window_bounds = array<i64: 1, 32>}, {pipeline_mode = #tpu.pipeline_mode<synchronous>, transform_indices = @transform_7, window_bounds = array<i64: 1, 32>}, {transform_indices = @transform_8, window_bounds = array<i64: 1, 8, 64>}, {transform_indices = @transform_9, window_bounds = array<i64: 1, 8, 64>}, {transform_indices = @transform_10, window_bounds = array<i64: 1, 8, 32>}, {transform_indices = @transform_11, window_bounds = array<i64: 1, 8, 32>}]} {
    %c0 = arith.constant 0 : index
    %c0_0 = arith.constant 0 : index
    %c0_1 = arith.constant 0 : index
    %0 = vector.load %arg2[%c0, %c0_0, %c0_1] : memref<1x8x32xf32, #tpu.memory_space<vmem>>, vector<1x8x32xf32>
    %1 = vector.shape_cast %0 : vector<1x8x32xf32> to vector<8x32xf32>
    %2 = arith.truncf %1 : vector<8x32xf32> to vector<8x32xbf16>
    %c0_2 = arith.constant 0 : index
    %c0_3 = arith.constant 0 : index
    %3 = vector.load %arg3[%c0_2, %c0_3] : memref<32x64xbf16, #tpu.memory_space<vmem>>, vector<32x64xbf16>
    %cst = arith.constant dense<0.000000e+00> : vector<8x64xf32>
    %4 = tpu.matmul %2, %3, %cst {dimension_numbers = #tpu.dot_dimension_numbers<[1], [0], [0], [1], [0, 0, 1, 1], [], []>} : vector<8x32xbf16>, vector<32x64xbf16>, vector<8x64xf32> -> vector<8x64xf32>
    %5 = arith.negf %4 : vector<8x64xf32>
    %6 = math.exp %5 : vector<8x64xf32>
    %cst_4 = arith.constant 1.000000e+00 : f32
    %7 = vector.broadcast %cst_4 : f32 to vector<8x64xf32>
    %8 = arith.addf %7, %6 : vector<8x64xf32>
    %9 = arith.divf %7, %8 : vector<8x64xf32>
    %10 = arith.mulf %4, %9 : vector<8x64xf32>
    %c0_5 = arith.constant 0 : index
    %c0_6 = arith.constant 0 : index
    %11 = vector.load %arg4[%c0_5, %c0_6] : memref<32x64xbf16, #tpu.memory_space<vmem>>, vector<32x64xbf16>
    %cst_7 = arith.constant dense<0.000000e+00> : vector<8x64xf32>
    %12 = tpu.matmul %2, %11, %cst_7 {dimension_numbers = #tpu.dot_dimension_numbers<[1], [0], [0], [1], [0, 0, 1, 1], [], []>} : vector<8x32xbf16>, vector<32x64xbf16>, vector<8x64xf32> -> vector<8x64xf32>
    %13 = arith.negf %12 : vector<8x64xf32>
    %14 = math.exp %13 : vector<8x64xf32>
    %cst_8 = arith.constant 1.000000e+00 : f32
    %15 = vector.broadcast %cst_8 : f32 to vector<8x64xf32>
    %16 = arith.addf %15, %14 : vector<8x64xf32>
    %17 = arith.divf %15, %16 : vector<8x64xf32>
    %18 = arith.mulf %12, %17 : vector<8x64xf32>
    %c0_9 = arith.constant 0 : index
    %c0_10 = arith.constant 0 : index
    %19 = vector.load %arg5[%c0_9, %c0_10] : memref<32x32xbf16, #tpu.memory_space<vmem>>, vector<32x32xbf16>
    %cst_11 = arith.constant dense<0.000000e+00> : vector<8x32xf32>
    %20 = tpu.matmul %2, %19, %cst_11 {dimension_numbers = #tpu.dot_dimension_numbers<[1], [0], [0], [1], [0, 0, 1, 1], [], []>} : vector<8x32xbf16>, vector<32x32xbf16>, vector<8x32xf32> -> vector<8x32xf32>
    %21 = arith.negf %20 : vector<8x32xf32>
    %22 = math.exp %21 : vector<8x32xf32>
    %cst_12 = arith.constant 1.000000e+00 : f32
    %23 = vector.broadcast %cst_12 : f32 to vector<8x32xf32>
    %24 = arith.addf %23, %22 : vector<8x32xf32>
    %25 = arith.divf %23, %24 : vector<8x32xf32>
    %26 = arith.mulf %20, %25 : vector<8x32xf32>
    %c0_13 = arith.constant 0 : index
    %c0_14 = arith.constant 0 : index
    %27 = vector.load %arg6[%c0_13, %c0_14] : memref<1x32xf32, #tpu.memory_space<vmem>>, vector<1x32xf32>
    %28 = vector.broadcast %27 : vector<1x32xf32> to vector<8x32xf32>
    %29 = arith.mulf %26, %28 : vector<8x32xf32>
    %c0_15 = arith.constant 0 : index
    %c0_16 = arith.constant 0 : index
    %30 = vector.load %arg7[%c0_15, %c0_16] : memref<1x32xf32, #tpu.memory_space<vmem>>, vector<1x32xf32>
    %31 = vector.broadcast %30 : vector<1x32xf32> to vector<8x32xf32>
    %32 = arith.addf %29, %31 : vector<8x32xf32>
    %cst_17 = arith.constant 0.0589255653 : f32
    %33 = vector.broadcast %cst_17 : f32 to vector<8x32xf32>
    %34 = arith.mulf %32, %33 : vector<8x32xf32>
    %c0_18 = arith.constant 0 : index
    %c0_19 = arith.constant 0 : index
    %35 = vector.load %arg8[%c0_18, %c0_19] : memref<1x32xf32, #tpu.memory_space<vmem>>, vector<1x32xf32>
    %36 = vector.broadcast %35 : vector<1x32xf32> to vector<8x32xf32>
    %37 = arith.mulf %26, %36 : vector<8x32xf32>
    %c0_20 = arith.constant 0 : index
    %c0_21 = arith.constant 0 : index
    %38 = vector.load %arg9[%c0_20, %c0_21] : memref<1x32xf32, #tpu.memory_space<vmem>>, vector<1x32xf32>
    %39 = vector.broadcast %38 : vector<1x32xf32> to vector<8x32xf32>
    %40 = arith.addf %37, %39 : vector<8x32xf32>
    %41 = arith.truncf %10 : vector<8x64xf32> to vector<8x64xbf16>
    %c0_22 = arith.constant 0 : index
    %c0_23 = arith.constant 0 : index
    %c0_24 = arith.constant 0 : index
    %42 = vector.load %arg10[%c0_22, %c0_23, %c0_24] : memref<1x8x64xbf16, #tpu.memory_space<vmem>>, vector<1x8x64xbf16>
    %43 = vector.shape_cast %42 : vector<1x8x64xbf16> to vector<8x64xbf16>
    %44 = vector.shape_cast %41 : vector<8x64xbf16> to vector<1x8x64xbf16>
    tpu.vector_store %arg10[%c0_22, %c0_23, %c0_24], %44 {strides = array<i32>} : memref<1x8x64xbf16, #tpu.memory_space<vmem>>, vector<1x8x64xbf16>,
    %45 = arith.truncf %18 : vector<8x64xf32> to vector<8x64xbf16>
    %c0_25 = arith.constant 0 : index
    %c0_26 = arith.constant 0 : index
    %c0_27 = arith.constant 0 : index
    %46 = vector.load %arg11[%c0_25, %c0_26, %c0_27] : memref<1x8x64xbf16, #tpu.memory_space<vmem>>, vector<1x8x64xbf16>
    %47 = vector.shape_cast %46 : vector<1x8x64xbf16> to vector<8x64xbf16>
    %48 = vector.shape_cast %45 : vector<8x64xbf16> to vector<1x8x64xbf16>
    tpu.vector_store %arg11[%c0_25, %c0_26, %c0_27], %48 {strides = array<i32>} : memref<1x8x64xbf16, #tpu.memory_space<vmem>>, vector<1x8x64xbf16>,
    %49 = arith.truncf %34 : vector<8x32xf32> to vector<8x32xbf16>
    %c0_28 = arith.constant 0 : index
    %c0_29 = arith.constant 0 : index
    %c0_30 = arith.constant 0 : index
    %50 = vector.load %arg12[%c0_28, %c0_29, %c0_30] : memref<1x8x32xbf16, #tpu.memory_space<vmem>>, vector<1x8x32xbf16>
    %51 = vector.shape_cast %50 : vector<1x8x32xbf16> to vector<8x32xbf16>
    %52 = vector.shape_cast %49 : vector<8x32xbf16> to vector<1x8x32xbf16>
    tpu.vector_store %arg12[%c0_28, %c0_29, %c0_30], %52 {strides = array<i32>} : memref<1x8x32xbf16, #tpu.memory_space<vmem>>, vector<1x8x32xbf16>,
    %53 = arith.truncf %40 : vector<8x32xf32> to vector<8x32xbf16>
    %c0_31 = arith.constant 0 : index
    %c0_32 = arith.constant 0 : index
    %c0_33 = arith.constant 0 : index
    %54 = vector.load %arg13[%c0_31, %c0_32, %c0_33] : memref<1x8x32xbf16, #tpu.memory_space<vmem>>, vector<1x8x32xbf16>
    %55 = vector.shape_cast %54 : vector<1x8x32xbf16> to vector<8x32xbf16>
    %56 = vector.shape_cast %53 : vector<8x32xbf16> to vector<1x8x32xbf16>
    tpu.vector_store %arg13[%c0_31, %c0_32, %c0_33], %56 {strides = array<i32>} : memref<1x8x32xbf16, #tpu.memory_space<vmem>>, vector<1x8x32xbf16>,
    return
  }
  func.func @transform_0(%arg0: i32, %arg1: i32) -> (i32, i32, i32) {
    %c0_i32 = arith.constant 0 : i32
    %c0_i32_0 = arith.constant 0 : i32
    return %arg0, %arg1, %c0_i32 : i32, i32, i32
  }
  func.func @transform_1(%arg0: i32, %arg1: i32) -> (i32, i32) {
    %c0_i32 = arith.constant 0 : i32
    %c0_i32_0 = arith.constant 0 : i32
    %c0_i32_1 = arith.constant 0 : i32
    return %c0_i32, %c0_i32_0 : i32, i32
  }
  func.func @transform_2(%arg0: i32, %arg1: i32) -> (i32, i32) {
    %c0_i32 = arith.constant 0 : i32
    %c0_i32_0 = arith.constant 0 : i32
    %c0_i32_1 = arith.constant 0 : i32
    return %c0_i32, %c0_i32_0 : i32, i32
  }
  func.func @transform_3(%arg0: i32, %arg1: i32) -> (i32, i32) {
    %c0_i32 = arith.constant 0 : i32
    %c0_i32_0 = arith.constant 0 : i32
    %c0_i32_1 = arith.constant 0 : i32
    return %c0_i32, %c0_i32_0 : i32, i32
  }
  func.func @transform_4(%arg0: i32, %arg1: i32) -> (i32, i32) {
    %c0_i32 = arith.constant 0 : i32
    %c0_i32_0 = arith.constant 0 : i32
    %c0_i32_1 = arith.constant 0 : i32
    return %c0_i32, %c0_i32_0 : i32, i32
  }
  func.func @transform_5(%arg0: i32, %arg1: i32) -> (i32, i32) {
    %c0_i32 = arith.constant 0 : i32
    %c0_i32_0 = arith.constant 0 : i32
    %c0_i32_1 = arith.constant 0 : i32
    return %c0_i32, %c0_i32_0 : i32, i32
  }
  func.func @transform_6(%arg0: i32, %arg1: i32) -> (i32, i32) {
    %c0_i32 = arith.constant 0 : i32
    %c0_i32_0 = arith.constant 0 : i32
    %c0_i32_1 = arith.constant 0 : i32
    return %c0_i32, %c0_i32_0 : i32, i32
  }
  func.func @transform_7(%arg0: i32, %arg1: i32) -> (i32, i32) {
    %c0_i32 = arith.constant 0 : i32
    %c0_i32_0 = arith.constant 0 : i32
    %c0_i32_1 = arith.constant 0 : i32
    return %c0_i32, %c0_i32_0 : i32, i32
  }
  func.func @transform_8(%arg0: i32, %arg1: i32) -> (i32, i32, i32) {
    %c0_i32 = arith.constant 0 : i32
    %c0_i32_0 = arith.constant 0 : i32
    return %arg0, %arg1, %c0_i32 : i32, i32, i32
  }
  func.func @transform_9(%arg0: i32, %arg1: i32) -> (i32, i32, i32) {
    %c0_i32 = arith.constant 0 : i32
    %c0_i32_0 = arith.constant 0 : i32
    return %arg0, %arg1, %c0_i32 : i32, i32, i32
  }
  func.func @transform_10(%arg0: i32, %arg1: i32) -> (i32, i32, i32) {
    %c0_i32 = arith.constant 0 : i32
    %c0_i32_0 = arith.constant 0 : i32
    return %arg0, %arg1, %c0_i32 : i32, i32, i32
  }
  func.func @transform_11(%arg0: i32, %arg1: i32) -> (i32, i32, i32) {
    %c0_i32 = arith.constant 0 : i32
    %c0_i32_0 = arith.constant 0 : i32
    return %arg0, %arg1, %c0_i32 : i32, i32, i32
  }
}

</mosaic_0001>

<llo_original>
// kernel: tpu_custom_call.1
$region0: #{tpu_custom_call.1}
  #allocation0 [shape = 'u32[]', space=smem, size = 0x4, offset = 0x4, fixed_abs, tag = 'smem constant byte address 0x4 - core index']
  #allocation1 [shape = 'u32[144,128]{1,0:T(1,128)}', space=vmem, size = 0x12000, scoped, tag = 'internal scratch']
  %s0 = inlined_call_operand.hbm [shape: f32[2,8,32], index: 0, kind: input, shape index: {}]
  %s1 = inlined_call_operand.hbm [shape: bf16[32,64], index: 1, kind: input, shape index: {}]
  %s2 = inlined_call_operand.hbm [shape: bf16[32,64], index: 2, kind: input, shape index: {}]
  %s3 = inlined_call_operand.hbm [shape: bf16[32,32], index: 3, kind: input, shape index: {}]
  %s4 = inlined_call_operand.hbm [shape: f32[1,32], index: 4, kind: input, shape index: {}]
  %s5 = inlined_call_operand.hbm [shape: f32[1,32], index: 5, kind: input, shape index: {}]
  %s6 = inlined_call_operand.hbm [shape: f32[1,32], index: 6, kind: input, shape index: {}]
  %s7 = inlined_call_operand.hbm [shape: f32[1,32], index: 7, kind: input, shape index: {}]
  %s8 = inlined_call_operand.hbm [shape: bf16[2,8,64], index: 8, kind: output, shape index: {0}]
  %s9 = inlined_call_operand.hbm [shape: bf16[2,8,64], index: 9, kind: output, shape index: {1}]
  %s10 = inlined_call_operand.hbm [shape: bf16[2,8,32], index: 10, kind: output, shape index: {2}]
  %s11 = inlined_call_operand.hbm [shape: bf16[2,8,32], index: 11, kind: output, shape index: {3}]
  %12 = xla_tuple %s8, %s9, %s10, %s11
  %s13 = sld [smem:[#allocation0]]
  $region121: #{tpu_custom_call.1} parent=0
    _
  %s15 = ssub.s32 1, %s13
  %s16 = scalar_select 0, %s15, %s13
  $region1: #{tpu_custom_call.1} parent=0
    #allocation2 [shape = 'u8[8192]{0}', space=vmem, size = 0x2000, scoped, tag = 'input window, operand 0']
    #allocation3 [shape = 's32[2]{0}', space=sflag, size = 0x8, scoped, tag = 'scoped memory for tpu_custom_call.1']
    #allocation4 [shape = 's32[2]{0}', space=sflag, size = 0x8, scoped, tag = 'scoped memory for tpu_custom_call.1']
    #allocation5 [shape = 'u8[8192]{0}', space=vmem, size = 0x2000, scoped, tag = 'input window, operand 1, single buffered']
    #allocation6 [shape = 's32[1]{0}', space=sflag, size = 0x4, scoped, tag = 'scoped memory for tpu_custom_call.1']
    #allocation7 [shape = 'u8[8192]{0}', space=vmem, size = 0x2000, scoped, tag = 'input window, operand 2, single buffered']
    #allocation8 [shape = 'u8[8192]{0}', space=vmem, size = 0x2000, scoped, tag = 'input window, operand 3, single buffered']
    #allocation9 [shape = 's32[1]{0}', space=sflag, size = 0x4, scoped, tag = 'scoped memory for tpu_custom_call.1']
    #allocation10 [shape = 'u8[512]{0}', space=vmem, size = 0x400, scoped, tag = 'input window, operand 4, single buffered']
    #allocation11 [shape = 'u8[512]{0}', space=vmem, size = 0x400, scoped, tag = 'input window, operand 5, single buffered']
    #allocation12 [shape = 's32[1]{0}', space=sflag, size = 0x4, scoped, tag = 'scoped memory for tpu_custom_call.1']
    #allocation13 [shape = 'u8[512]{0}', space=vmem, size = 0x400, scoped, tag = 'input window, operand 6, single buffered']
    #allocation14 [shape = 'u8[512]{0}', space=vmem, size = 0x400, scoped, tag = 'input window, operand 7, single buffered']
    #allocation15 [shape = 's32[1]{0}', space=sflag, size = 0x4, scoped, tag = 'scoped memory for tpu_custom_call.1']
    #allocation16 [shape = 'u8[4096]{0}', space=vmem, size = 0x1000, scoped, tag = 'output window, operand 0']
    #allocation17 [shape = 'u8[4096]{0}', space=vmem, size = 0x1000, scoped, tag = 'output window, operand 1']
    #allocation18 [shape = 's32[2]{0}', space=sflag, size = 0x8, scoped, tag = 'scoped memory for tpu_custom_call.1']
    #allocation19 [shape = 'u8[4096]{0}', space=vmem, size = 0x1000, scoped, tag = 'output window, operand 2']
    #allocation20 [shape = 'u8[4096]{0}', space=vmem, size = 0x1000, scoped, tag = 'output window, operand 3']
    #allocation21 [shape = 's32[2]{0}', space=sflag, size = 0x8, scoped, tag = 'scoped memory for tpu_custom_call.1']
    %17 = vsyncpa [#allocation3], 0
    %s18 = scalar_lea.sflag [#allocation3], 1
    %19 = vsyncpa %s18, 0
    %20 = vsyncpa [#allocation6], 0
    %21 = vsyncpa [#allocation9], 0
    %22 = vsyncpa [#allocation12], 0
    %23 = vsyncpa [#allocation15], 0
    %24 = vsyncpa [#allocation4], 0
    %s25 = scalar_lea.sflag [#allocation4], 1
    %26 = vsyncpa %s25, 0
    %27 = vsyncpa [#allocation18], 0
    %s28 = scalar_lea.sflag [#allocation18], 1
    %29 = vsyncpa %s28, 0
    %30 = vsyncpa [#allocation21], 0
    %s31 = scalar_lea.sflag [#allocation21], 1
    %32 = vsyncpa %s31, 0
    loop: start=0, step=1, limit=4
    $region2: #{tpu_custom_call.1} parent=1 // loop_pre_header
      _
    $region3: #{tpu_custom_call.1} parent=1 // loop_header
      %s34 = sphi 0, %s38
      %p35 = scmp.ge.s32.totalorder %s34, 4
      %s41 = sphi 0, %s53
      %s42 = sphi 0, %s49
      %s43 = sphi 0, %s41
      %s44 = sphi 0, %s42
      %s45 = sphi 0, %s43
      %s46 = sphi 0, %s44
      %s58 = sphi 0, %s60
      %s61 = sphi 0, %s58
      %s62 = sphi 0, %s61
      %s78 = sphi 0, %s62
      %s82 = sphi 0, %s82
      %s84 = sphi 0, %s82
      %s85 = sphi 0, %s84
      %s99 = sphi 0, %s85
      %s103 = sphi 0, %s103
      %s105 = sphi 0, %s103
      %s106 = sphi 0, %s105
      %s120 = sphi 0, %s106
      %s124 = sphi 0, %s124
      %s126 = sphi 0, %s124
      %s127 = sphi 0, %s126
      %s141 = sphi 0, %s127
      %s145 = sphi 0, %s145
      %s147 = sphi 0, %s145
      %s148 = sphi 0, %s147
      %s162 = sphi 0, %s148
      %s166 = sphi 0, %s166
      %s168 = sphi 0, %s166
      %s169 = sphi 0, %s168
      %s183 = sphi 0, %s169
      %s187 = sphi 0, %s187
      %s189 = sphi 0, %s187
      %s190 = sphi 0, %s189
      %s204 = sphi 0, %s190
      %s208 = sphi 0, %s208
      %s210 = sphi 0, %s208
      %s211 = sphi 0, %s210
      %s225 = sphi 0, %s211
      %s233 = sphi 0, %s235
      %s236 = sphi 0, %s233
      %s237 = sphi 0, %s236
      %s253 = sphi 0, %s237
      %s261 = sphi 0, %s263
      %s264 = sphi 0, %s261
      %s265 = sphi 0, %s264
      %s281 = sphi 0, %s265
      %s289 = sphi 0, %s291
      %s292 = sphi 0, %s289
      %s293 = sphi 0, %s292
      %s309 = sphi 0, %s293
      %s317 = sphi 0, %s319
      %s320 = sphi 0, %s317
      %s321 = sphi 0, %s320
      %s337 = sphi 0, %s321
    $region4: #{tpu_custom_call.1} parent=1 // loop_header_branch
      %37 = sbr.rel (%p35) target = $region8
    $region5: #{tpu_custom_call.1} parent=1 // loop_body
      %s39 = ssub.s32 %s34, 1
      %s40 = ssub.s32 %s34, 2
      %s47 = sadd.s32 1, %s42
      %p48 = scmp.ge.s32.totalorder %s47, 1
      %s49 = scalar_select %p48, 0, %s47
      %s50 = sadd.s32 1, %s41
      %s51 = scalar_select %p48, %s50, %s41
      %p52 = scmp.ge.s32.totalorder %s51, 2
      %s53 = scalar_select %p52, 0, %s51
      %s54 = ssub.s32 %s41, %s53
      %s55 = ssub.s32 %s42, %s49
      %s56 = sor.u32 %s54, %s55
      %p57 = scmp.eq.s32.totalorder %s56, 0
      %s59 = sadd.s32 %s58, 1
      %s60 = scalar_select %p57, %s58, %s59
      %p63 = pneg %p57
      %p64 = scmp.eq.s32.totalorder %s34, 1
      %p65 = por %p63, %p64
      %p66 = scmp.ne.s32.totalorder %s58, %s61
      %p67 = scmp.eq.s32.totalorder %s34, 0
      %p68 = por %p66, %p67
      %p69 = scmp.ne.s32.totalorder %s58, %s61
      %p70 = scmp.eq.s32.totalorder %s39, 1
      %p71 = por %p69, %p70
      %p72 = scmp.ne.s32.totalorder %s61, %s62
      %p73 = scmp.eq.s32.totalorder %s39, 0
      %p74 = por %p72, %p73
      %p75 = scmp.ne.s32.totalorder %s61, %s62
      %p76 = scmp.eq.s32.totalorder %s40, 1
      %p77 = por %p75, %p76
      %p79 = scmp.ne.s32.totalorder %s62, %s78
      %p80 = scmp.eq.s32.totalorder %s40, 0
      %p81 = por %p79, %p80
      %s83 = sadd.s32 %s82, 1
      %p86 = scmp.eq.s32.totalorder %s34, 1
      %p87 = scmp.ne.s32.totalorder %s82, %s84
      %p88 = scmp.eq.s32.totalorder %s34, 0
      %p89 = por %p87, %p88
      %p90 = scmp.ne.s32.totalorder %s82, %s84
      %p91 = scmp.eq.s32.totalorder %s39, 1
      %p92 = por %p90, %p91
      %p93 = scmp.ne.s32.totalorder %s84, %s85
      %p94 = scmp.eq.s32.totalorder %s39, 0
      %p95 = por %p93, %p94
      %p96 = scmp.ne.s32.totalorder %s84, %s85
      %p97 = scmp.eq.s32.totalorder %s40, 1
      %p98 = por %p96, %p97
      %p100 = scmp.ne.s32.totalorder %s85, %s99
      %p101 = scmp.eq.s32.totalorder %s40, 0
      %p102 = por %p100, %p101
      %s104 = sadd.s32 %s103, 1
      %p107 = scmp.eq.s32.totalorder %s34, 1
      %p108 = scmp.ne.s32.totalorder %s103, %s105
      %p109 = scmp.eq.s32.totalorder %s34, 0
      %p110 = por %p108, %p109
      %p111 = scmp.ne.s32.totalorder %s103, %s105
      %p112 = scmp.eq.s32.totalorder %s39, 1
      %p113 = por %p111, %p112
      %p114 = scmp.ne.s32.totalorder %s105, %s106
      %p115 = scmp.eq.s32.totalorder %s39, 0
      %p116 = por %p114, %p115
      %p117 = scmp.ne.s32.totalorder %s105, %s106
      %p118 = scmp.eq.s32.totalorder %s40, 1
      %p119 = por %p117, %p118
      %p121 = scmp.ne.s32.totalorder %s106, %s120
      %p122 = scmp.eq.s32.totalorder %s40, 0
      %p123 = por %p121, %p122
      %s125 = sadd.s32 %s124, 1
      %p128 = scmp.eq.s32.totalorder %s34, 1
      %p129 = scmp.ne.s32.totalorder %s124, %s126
      %p130 = scmp.eq.s32.totalorder %s34, 0
      %p131 = por %p129, %p130
      %p132 = scmp.ne.s32.totalorder %s124, %s126
      %p133 = scmp.eq.s32.totalorder %s39, 1
      %p134 = por %p132, %p133
      %p135 = scmp.ne.s32.totalorder %s126, %s127
      %p136 = scmp.eq.s32.totalorder %s39, 0
      %p137 = por %p135, %p136
      %p138 = scmp.ne.s32.totalorder %s126, %s127
      %p139 = scmp.eq.s32.totalorder %s40, 1
      %p140 = por %p138, %p139
      %p142 = scmp.ne.s32.totalorder %s127, %s141
      %p143 = scmp.eq.s32.totalorder %s40, 0
      %p144 = por %p142, %p143
      %s146 = sadd.s32 %s145, 1
      %p149 = scmp.eq.s32.totalorder %s34, 1
      %p150 = scmp.ne.s32.totalorder %s145, %s147
      %p151 = scmp.eq.s32.totalorder %s34, 0
      %p152 = por %p150, %p151
      %p153 = scmp.ne.s32.totalorder %s145, %s147
      %p154 = scmp.eq.s32.totalorder %s39, 1
      %p155 = por %p153, %p154
      %p156 = scmp.ne.s32.totalorder %s147, %s148
      %p157 = scmp.eq.s32.totalorder %s39, 0
      %p158 = por %p156, %p157
      %p159 = scmp.ne.s32.totalorder %s147, %s148
      %p160 = scmp.eq.s32.totalorder %s40, 1
      %p161 = por %p159, %p160
      %p163 = scmp.ne.s32.totalorder %s148, %s162
      %p164 = scmp.eq.s32.totalorder %s40, 0
      %p165 = por %p163, %p164
      %s167 = sadd.s32 %s166, 1
      %p170 = scmp.eq.s32.totalorder %s34, 1
      %p171 = scmp.ne.s32.totalorder %s166, %s168
      %p172 = scmp.eq.s32.totalorder %s34, 0
      %p173 = por %p171, %p172
      %p174 = scmp.ne.s32.totalorder %s166, %s168
      %p175 = scmp.eq.s32.totalorder %s39, 1
      %p176 = por %p174, %p175
      %p177 = scmp.ne.s32.totalorder %s168, %s169
      %p178 = scmp.eq.s32.totalorder %s39, 0
      %p179 = por %p177, %p178
      %p180 = scmp.ne.s32.totalorder %s168, %s169
      %p181 = scmp.eq.s32.totalorder %s40, 1
      %p182 = por %p180, %p181
      %p184 = scmp.ne.s32.totalorder %s169, %s183
      %p185 = scmp.eq.s32.totalorder %s40, 0
      %p186 = por %p184, %p185
      %s188 = sadd.s32 %s187, 1
      %p191 = scmp.eq.s32.totalorder %s34, 1
      %p192 = scmp.ne.s32.totalorder %s187, %s189
      %p193 = scmp.eq.s32.totalorder %s34, 0
      %p194 = por %p192, %p193
      %p195 = scmp.ne.s32.totalorder %s187, %s189
      %p196 = scmp.eq.s32.totalorder %s39, 1
      %p197 = por %p195, %p196
      %p198 = scmp.ne.s32.totalorder %s189, %s190
      %p199 = scmp.eq.s32.totalorder %s39, 0
      %p200 = por %p198, %p199
      %p201 = scmp.ne.s32.totalorder %s189, %s190
      %p202 = scmp.eq.s32.totalorder %s40, 1
      %p203 = por %p201, %p202
      %p205 = scmp.ne.s32.totalorder %s190, %s204
      %p206 = scmp.eq.s32.totalorder %s40, 0
      %p207 = por %p205, %p206
      %s209 = sadd.s32 %s208, 1
      %p212 = scmp.eq.s32.totalorder %s34, 1
      %p213 = scmp.ne.s32.totalorder %s208, %s210
      %p214 = scmp.eq.s32.totalorder %s34, 0
      %p215 = por %p213, %p214
      %p216 = scmp.ne.s32.totalorder %s208, %s210
      %p217 = scmp.eq.s32.totalorder %s39, 1
      %p218 = por %p216, %p217
      %p219 = scmp.ne.s32.totalorder %s210, %s211
      %p220 = scmp.eq.s32.totalorder %s39, 0
      %p221 = por %p219, %p220
      %p222 = scmp.ne.s32.totalorder %s210, %s211
      %p223 = scmp.eq.s32.totalorder %s40, 1
      %p224 = por %p222, %p223
      %p226 = scmp.ne.s32.totalorder %s211, %s225
      %p227 = scmp.eq.s32.totalorder %s40, 0
      %p228 = por %p226, %p227
      %s229 = ssub.s32 %s41, %s53
      %s230 = ssub.s32 %s42, %s49
      %s231 = sor.u32 %s229, %s230
      %p232 = scmp.eq.s32.totalorder %s231, 0
      %s234 = sadd.s32 %s233, 1
      %s235 = scalar_select %p232, %s233, %s234
      %p238 = pneg %p232
      %p239 = scmp.eq.s32.totalorder %s34, 1
      %p240 = por %p238, %p239
      %p241 = scmp.ne.s32.totalorder %s233, %s236
      %p242 = scmp.eq.s32.totalorder %s34, 0
      %p243 = por %p241, %p242
      %p244 = scmp.ne.s32.totalorder %s233, %s236
      %p245 = scmp.eq.s32.totalorder %s39, 1
      %p246 = por %p244, %p245
      %p247 = scmp.ne.s32.totalorder %s236, %s237
      %p248 = scmp.eq.s32.totalorder %s39, 0
      %p249 = por %p247, %p248
      %p250 = scmp.ne.s32.totalorder %s236, %s237
      %p251 = scmp.eq.s32.totalorder %s40, 1
      %p252 = por %p250, %p251
      %p254 = scmp.ne.s32.totalorder %s237, %s253
      %p255 = scmp.eq.s32.totalorder %s40, 0
      %p256 = por %p254, %p255
      %s257 = ssub.s32 %s41, %s53
      %s258 = ssub.s32 %s42, %s49
      %s259 = sor.u32 %s257, %s258
      %p260 = scmp.eq.s32.totalorder %s259, 0
      %s262 = sadd.s32 %s261, 1
      %s263 = scalar_select %p260, %s261, %s262
      %p266 = pneg %p260
      %p267 = scmp.eq.s32.totalorder %s34, 1
      %p268 = por %p266, %p267
      %p269 = scmp.ne.s32.totalorder %s261, %s264
      %p270 = scmp.eq.s32.totalorder %s34, 0
      %p271 = por %p269, %p270
      %p272 = scmp.ne.s32.totalorder %s261, %s264
      %p273 = scmp.eq.s32.totalorder %s39, 1
      %p274 = por %p272, %p273
      %p275 = scmp.ne.s32.totalorder %s264, %s265
      %p276 = scmp.eq.s32.totalorder %s39, 0
      %p277 = por %p275, %p276
      %p278 = scmp.ne.s32.totalorder %s264, %s265
      %p279 = scmp.eq.s32.totalorder %s40, 1
      %p280 = por %p278, %p279
      %p282 = scmp.ne.s32.totalorder %s265, %s281
      %p283 = scmp.eq.s32.totalorder %s40, 0
      %p284 = por %p282, %p283
      %s285 = ssub.s32 %s41, %s53
      %s286 = ssub.s32 %s42, %s49
      %s287 = sor.u32 %s285, %s286
      %p288 = scmp.eq.s32.totalorder %s287, 0
      %s290 = sadd.s32 %s289, 1
      %s291 = scalar_select %p288, %s289, %s290
      %p294 = pneg %p288
      %p295 = scmp.eq.s32.totalorder %s34, 1
      %p296 = por %p294, %p295
      %p297 = scmp.ne.s32.totalorder %s289, %s292
      %p298 = scmp.eq.s32.totalorder %s34, 0
      %p299 = por %p297, %p298
      %p300 = scmp.ne.s32.totalorder %s289, %s292
      %p301 = scmp.eq.s32.totalorder %s39, 1
      %p302 = por %p300, %p301
      %p303 = scmp.ne.s32.totalorder %s292, %s293
      %p304 = scmp.eq.s32.totalorder %s39, 0
      %p305 = por %p303, %p304
      %p306 = scmp.ne.s32.totalorder %s292, %s293
      %p307 = scmp.eq.s32.totalorder %s40, 1
      %p308 = por %p306, %p307
      %p310 = scmp.ne.s32.totalorder %s293, %s309
      %p311 = scmp.eq.s32.totalorder %s40, 0
      %p312 = por %p310, %p311
      %s313 = ssub.s32 %s41, %s53
      %s314 = ssub.s32 %s42, %s49
      %s315 = sor.u32 %s313, %s314
      %p316 = scmp.eq.s32.totalorder %s315, 0
      %s318 = sadd.s32 %s317, 1
      %s319 = scalar_select %p316, %s317, %s318
      %p322 = pneg %p316
      %p323 = scmp.eq.s32.totalorder %s34, 1
      %p324 = por %p322, %p323
      %p325 = scmp.ne.s32.totalorder %s317, %s320
      %p326 = scmp.eq.s32.totalorder %s34, 0
      %p327 = por %p325, %p326
      %p328 = scmp.ne.s32.totalorder %s317, %s320
      %p329 = scmp.eq.s32.totalorder %s39, 1
      %p330 = por %p328, %p329
      %p331 = scmp.ne.s32.totalorder %s320, %s321
      %p332 = scmp.eq.s32.totalorder %s39, 0
      %p333 = por %p331, %p332
      %p334 = scmp.ne.s32.totalorder %s320, %s321
      %p335 = scmp.eq.s32.totalorder %s40, 1
      %p336 = por %p334, %p335
      %p338 = scmp.ne.s32.totalorder %s321, %s337
      %p339 = scmp.eq.s32.totalorder %s40, 0
      %p340 = por %p338, %p339
      %p341 = scmp.le.s32.totalorder 1, %s34
      %p342 = scmp.lt.s32.totalorder %s34, 3
      %p343 = pnand %p341, %p342
      %p344 = pneg %p343
      // Predicated region
      $region9: #{tpu_custom_call.1} parent=5 // pred_check
        _
      $region10: #{tpu_custom_call.1} parent=5 // pred_check_branch
        %346 = sbr.rel (%p343) target = $region12
      $region11: #{tpu_custom_call.1} parent=5 // pred_region
        %s347 = ssub.s32 %s34, 1
        // Predicated region
        $region13: #{tpu_custom_call.1} parent=11 // pred_check
          %p348 = pneg %p95
        $region14: #{tpu_custom_call.1} parent=11 // pred_check_branch
          %350 = sbr.rel (%p348) target = $region16
        $region15: #{tpu_custom_call.1} parent=11 // pred_region
          %s352 = ssub.s32 256, 256
          %353 = vsyncadd [#allocation6], %s352
          %s354 = sshll.u32 [#allocation5], 4
          %s355 = int_to_ptr.vmem [resolvable:$true] %s354
          %360 = dma.hbm_to_vmem [thread:$0]  %s1, 256, %s355, [#allocation6], 64, 64, 4
        $region16: #{tpu_custom_call.1} parent=11 // pred_fallthru
          _
        // Predicated region
        $region17: #{tpu_custom_call.1} parent=11 // pred_check
          %p361 = pneg %p116
        $region18: #{tpu_custom_call.1} parent=11 // pred_check_branch
          %363 = sbr.rel (%p361) target = $region20
        $region19: #{tpu_custom_call.1} parent=11 // pred_region
          %s365 = ssub.s32 256, 256
          %366 = vsyncadd [#allocation6], %s365
          %s367 = sshll.u32 [#allocation7], 4
          %s368 = int_to_ptr.vmem [resolvable:$true] %s367
          %373 = dma.hbm_to_vmem [thread:$0]  %s2, 256, %s368, [#allocation6], 64, 64, 4
        $region20: #{tpu_custom_call.1} parent=11 // pred_fallthru
          _
        // Predicated region
        $region21: #{tpu_custom_call.1} parent=11 // pred_check
          %p374 = pneg %p137
        $region22: #{tpu_custom_call.1} parent=11 // pred_check_branch
          %376 = sbr.rel (%p374) target = $region24
        $region23: #{tpu_custom_call.1} parent=11 // pred_region
          %s378 = ssub.s32 256, 256
          %379 = vsyncadd [#allocation9], %s378
          %s380 = sshll.u32 [#allocation8], 4
          %s381 = int_to_ptr.vmem [resolvable:$true] %s380
          %386 = dma.hbm_to_vmem [thread:$0]  %s3, 256, %s381, [#allocation9], 64, 64, 4
        $region24: #{tpu_custom_call.1} parent=11 // pred_fallthru
          _
        // Predicated region
        $region25: #{tpu_custom_call.1} parent=11 // pred_check
          %p387 = pneg %p158
        $region26: #{tpu_custom_call.1} parent=11 // pred_check_branch
          %389 = sbr.rel (%p387) target = $region28
        $region27: #{tpu_custom_call.1} parent=11 // pred_region
          %s391 = ssub.s32 16, 16
          %392 = vsyncadd [#allocation9], %s391
          %s394 = sshll.u32 [#allocation10], 4
          %s395 = int_to_ptr.vmem [resolvable:$true] %s394
          %397 = dma.hbm_to_vmem [thread:$0]  %s4, 16, %s395, [#allocation9]
        $region28: #{tpu_custom_call.1} parent=11 // pred_fallthru
          _
        // Predicated region
        $region29: #{tpu_custom_call.1} parent=11 // pred_check
          %p398 = pneg %p179
        $region30: #{tpu_custom_call.1} parent=11 // pred_check_branch
          %400 = sbr.rel (%p398) target = $region32
        $region31: #{tpu_custom_call.1} parent=11 // pred_region
          %s402 = ssub.s32 16, 16
          %403 = vsyncadd [#allocation12], %s402
          %s405 = sshll.u32 [#allocation11], 4
          %s406 = int_to_ptr.vmem [resolvable:$true] %s405
          %408 = dma.hbm_to_vmem [thread:$0]  %s5, 16, %s406, [#allocation12]
        $region32: #{tpu_custom_call.1} parent=11 // pred_fallthru
          _
        // Predicated region
        $region33: #{tpu_custom_call.1} parent=11 // pred_check
          %p409 = pneg %p200
        $region34: #{tpu_custom_call.1} parent=11 // pred_check_branch
          %411 = sbr.rel (%p409) target = $region36
        $region35: #{tpu_custom_call.1} parent=11 // pred_region
          %s413 = ssub.s32 16, 16
          %414 = vsyncadd [#allocation12], %s413
          %s416 = sshll.u32 [#allocation13], 4
          %s417 = int_to_ptr.vmem [resolvable:$true] %s416
          %419 = dma.hbm_to_vmem [thread:$0]  %s6, 16, %s417, [#allocation12]
        $region36: #{tpu_custom_call.1} parent=11 // pred_fallthru
          _
        // Predicated region
        $region37: #{tpu_custom_call.1} parent=11 // pred_check
          %p420 = pneg %p221
        $region38: #{tpu_custom_call.1} parent=11 // pred_check_branch
          %422 = sbr.rel (%p420) target = $region40
        $region39: #{tpu_custom_call.1} parent=11 // pred_region
          %s424 = ssub.s32 16, 16
          %425 = vsyncadd [#allocation15], %s424
          %s427 = sshll.u32 [#allocation14], 4
          %s428 = int_to_ptr.vmem [resolvable:$true] %s427
          %430 = dma.hbm_to_vmem [thread:$0]  %s7, 16, %s428, [#allocation15]
        $region40: #{tpu_custom_call.1} parent=11 // pred_fallthru
          _
      $region12: #{tpu_custom_call.1} parent=5 // pred_fallthru
        _
      %p431 = scmp.lt.s32.totalorder %s34, 2
      // Predicated region
      $region41: #{tpu_custom_call.1} parent=5 // pred_check
        %p432 = pneg %p431
      $region42: #{tpu_custom_call.1} parent=5 // pred_check_branch
        %434 = sbr.rel (%p432) target = $region44
      $region43: #{tpu_custom_call.1} parent=5 // pred_region
        // Predicated region
        $region45: #{tpu_custom_call.1} parent=43 // pred_check
          %p435 = pneg %p68
        $region46: #{tpu_custom_call.1} parent=43 // pred_check_branch
          %437 = sbr.rel (%p435) target = $region48
        $region47: #{tpu_custom_call.1} parent=43 // pred_region
          %s438 = sand.u32 %s58, 1
          %s439 = scalar_lea.sflag [#allocation3], %s438
          %s440 = sand.u32 %s58, 1
          %s441 = smul.addr %s440, 8
          %s442 = scalar_lea.vmem [#allocation2], %s441
          %s444 = ssub.s32 128, 128
          %445 = vsyncadd %s439, %s444
          %s446 = sadd.s32 %s42, %s41
          %s447 = smul.addr %s446, 128
          %s448 = scalar_lea.hbm %s0, %s447
          %s450 = sshll.u32 %s442, 4
          %s451 = int_to_ptr.vmem [resolvable:$true] %s450
          %453 = dma.hbm_to_vmem [thread:$0]  %s448, 128, %s451, %s439
        $region48: #{tpu_custom_call.1} parent=43 // pred_fallthru
          _
      $region44: #{tpu_custom_call.1} parent=5 // pred_fallthru
        _
      %p454 = scmp.le.s32.totalorder 1, %s34
      %p455 = scmp.lt.s32.totalorder %s34, 3
      %p456 = pnand %p454, %p455
      %p457 = pneg %p456
      // Predicated region
      $region49: #{tpu_custom_call.1} parent=5 // pred_check
        _
      $region50: #{tpu_custom_call.1} parent=5 // pred_check_branch
        %459 = sbr.rel (%p456) target = $region52
      $region51: #{tpu_custom_call.1} parent=5 // pred_region
        %s460 = ssub.s32 %s34, 1
        %s461 = sand.u32 %s61, 1
        %s462 = scalar_lea.sflag [#allocation3], %s461
        %s463 = sand.u32 %s61, 1
        %s464 = smul.addr %s463, 8
        %s465 = scalar_lea.vmem [#allocation2], %s464
        // Predicated region
        $region53: #{tpu_custom_call.1} parent=51 // pred_check
          %p466 = pneg %p74
        $region54: #{tpu_custom_call.1} parent=51 // pred_check_branch
          %468 = sbr.rel (%p466) target = $region56
        $region55: #{tpu_custom_call.1} parent=51 // pred_region
          %469 = dma.done %s462, 128
        $region56: #{tpu_custom_call.1} parent=51 // pred_fallthru
          _
        // Predicated region
        $region57: #{tpu_custom_call.1} parent=51 // pred_check
          %p470 = pneg %p95
        $region58: #{tpu_custom_call.1} parent=51 // pred_check_branch
          %472 = sbr.rel (%p470) target = $region60
        $region59: #{tpu_custom_call.1} parent=51 // pred_region
          %473 = dma.done [#allocation6], 256
        $region60: #{tpu_custom_call.1} parent=51 // pred_fallthru
          _
        // Predicated region
        $region61: #{tpu_custom_call.1} parent=51 // pred_check
          %p474 = pneg %p116
        $region62: #{tpu_custom_call.1} parent=51 // pred_check_branch
          %476 = sbr.rel (%p474) target = $region64
        $region63: #{tpu_custom_call.1} parent=51 // pred_region
          %477 = dma.done [#allocation6], 256
        $region64: #{tpu_custom_call.1} parent=51 // pred_fallthru
          _
        // Predicated region
        $region65: #{tpu_custom_call.1} parent=51 // pred_check
          %p478 = pneg %p137
        $region66: #{tpu_custom_call.1} parent=51 // pred_check_branch
          %480 = sbr.rel (%p478) target = $region68
        $region67: #{tpu_custom_call.1} parent=51 // pred_region
          %481 = dma.done [#allocation9], 256
        $region68: #{tpu_custom_call.1} parent=51 // pred_fallthru
          _
        // Predicated region
        $region69: #{tpu_custom_call.1} parent=51 // pred_check
          %p482 = pneg %p158
        $region70: #{tpu_custom_call.1} parent=51 // pred_check_branch
          %484 = sbr.rel (%p482) target = $region72
        $region71: #{tpu_custom_call.1} parent=51 // pred_region
          %485 = dma.done [#allocation9], 16
        $region72: #{tpu_custom_call.1} parent=51 // pred_fallthru
          _
        // Predicated region
        $region73: #{tpu_custom_call.1} parent=51 // pred_check
          %p486 = pneg %p179
        $region74: #{tpu_custom_call.1} parent=51 // pred_check_branch
          %488 = sbr.rel (%p486) target = $region76
        $region75: #{tpu_custom_call.1} parent=51 // pred_region
          %489 = dma.done [#allocation12], 16
        $region76: #{tpu_custom_call.1} parent=51 // pred_fallthru
          _
        // Predicated region
        $region77: #{tpu_custom_call.1} parent=51 // pred_check
          %p490 = pneg %p200
        $region78: #{tpu_custom_call.1} parent=51 // pred_check_branch
          %492 = sbr.rel (%p490) target = $region80
        $region79: #{tpu_custom_call.1} parent=51 // pred_region
          %493 = dma.done [#allocation12], 16
        $region80: #{tpu_custom_call.1} parent=51 // pred_fallthru
          _
        // Predicated region
        $region81: #{tpu_custom_call.1} parent=51 // pred_check
          %p494 = pneg %p221
        $region82: #{tpu_custom_call.1} parent=51 // pred_check_branch
          %496 = sbr.rel (%p494) target = $region84
        $region83: #{tpu_custom_call.1} parent=51 // pred_region
          %497 = dma.done [#allocation15], 16
        $region84: #{tpu_custom_call.1} parent=51 // pred_fallthru
          _
        %s498 = sand.u32 %s61, 1
        %s499 = scalar_lea.sflag [#allocation3], %s498
        %s500 = sand.u32 %s61, 1
        %s501 = smul.addr %s500, 8
        %s502 = scalar_lea.vmem [#allocation2], %s501
        %p503 = pneg %p74
        %p504 = pneg %p71
        %p505 = pneg %p95
        %p506 = pneg %p92
        %p507 = pneg %p116
        %p508 = pneg %p113
        %p509 = pneg %p137
        %p510 = pneg %p134
        %p511 = pneg %p158
        %p512 = pneg %p155
        %p513 = pneg %p179
        %p514 = pneg %p176
        %p515 = pneg %p200
        %p516 = pneg %p197
        %p517 = pneg %p221
        %p518 = pneg %p218
        %p519 = pneg %p249
        %p520 = pneg %p246
        %s521 = sand.u32 %s236, 1
        %s522 = scalar_lea.sflag [#allocation4], %s521
        %s523 = sand.u32 %s236, 1
        %s524 = smul.addr %s523, 4
        %s525 = scalar_lea.vmem [#allocation16], %s524
        %p526 = pneg %p277
        %p527 = pneg %p274
        %s528 = sand.u32 %s39, 1
        %s529 = scalar_lea.sflag [#allocation18], %s528
        %s530 = sand.u32 %s264, 1
        %s531 = smul.addr %s530, 4
        %s532 = scalar_lea.vmem [#allocation17], %s531
        %p533 = pneg %p305
        %p534 = pneg %p302
        %s535 = sand.u32 %s39, 1
        %s536 = scalar_lea.sflag [#allocation18], %s535
        %s537 = sand.u32 %s292, 1
        %s538 = smul.addr %s537, 4
        %s539 = scalar_lea.vmem [#allocation19], %s538
        %p540 = pneg %p333
        %p541 = pneg %p330
        %s542 = sand.u32 %s320, 1
        %s543 = scalar_lea.sflag [#allocation21], %s542
        %s544 = sand.u32 %s320, 1
        %s545 = smul.addr %s544, 4
        %s546 = scalar_lea.vmem [#allocation20], %s545
        %v548 = vld [vmem:[%s465] sm:$0xff]
        %v549 = vpack.c.bf16 %v548, %v548
        %v550 = vld [vmem:[#allocation5] sm:$0xf]
        %v551 = vld [vmem:[#allocation5 + $0x4] sm:$0xf]
        %v552 = vld [vmem:[#allocation5 + $0x8] sm:$0xf]
        %v553 = vld [vmem:[#allocation5 + $0xc] sm:$0xf]
        %v558 = vunpack.c.l.b16 %v550
        %v559 = vunpack.c.l.b16 %v551
        %v560 = vunpack.c.l.b16 %v552
        %v561 = vunpack.c.l.b16 %v553
        %v562 = vpack.c.b16 %v559, %v558
        %v563 = vpack.c.b16 %v561, %v560
        %vm566 = vcmask 261120
        %v568 = vsel %vm566, %v549, 0
        %570 = vmatprep.subr.bf16.mxu0 0
        %571 = vmatpush1.bf16.msra.mxu0 %v562
        %572 = vmatprep.subr.bf16.mxu0 0
        %573 = vmatpush1.bf16.msra.mxu0 %v563
        %574 = vmatprep.subr.bf16.mxu0 0
        %575 = vmatpush1.bf16.msra.mxu0 0
        %576 = vmatprep.subr.bf16.mxu0 0
        %577 = vmatpush1.bf16.msra.mxu0 0
        %578 = vmatprep.subr.bf16.mxu0 0
        %579 = vmatpush1.bf16.msra.mxu0 0
        %580 = vmatprep.subr.bf16.mxu0 0
        %581 = vmatpush1.bf16.msra.mxu0 0
        %582 = vmatprep.subr.bf16.mxu0 0
        %583 = vmatpush1.bf16.msra.mxu0 0
        %584 = vmatprep.subr.bf16.mxu0 0
        %585 = vmatpush1.bf16.msra.mxu0 0
        %586 = vmatprep.subr.bf16.mxu0 0
        %587 = vmatpush1.bf16.msra.mxu0 0
        %588 = vmatprep.subr.bf16.mxu0 0
        %589 = vmatpush1.bf16.msra.mxu0 0
        %590 = vmatprep.subr.bf16.mxu0 0
        %591 = vmatpush1.bf16.msra.mxu0 0
        %592 = vmatprep.subr.bf16.mxu0 0
        %593 = vmatpush1.bf16.msra.mxu0 0
        %594 = vmatprep.subr.bf16.mxu0 0
        %595 = vmatpush1.bf16.msra.mxu0 0
        %596 = vmatprep.subr.bf16.mxu0 0
        %597 = vmatpush1.bf16.msra.mxu0 0
        %598 = vmatprep.subr.bf16.mxu0 0
        %599 = vmatpush1.bf16.msra.mxu0 0
        %600 = vmatprep.subr.bf16.mxu0 0
        %601 = vmatpush1.bf16.msra.mxu0 0
        %602 = vmatprep.mubr.bf16.mxu0 0
        %603 = vmatmul.mubr.bf16.gmra.mrb[0].mxu0 %v568
        %v604 = vpop.f32.mrb[0].mxu0
        %v605 = vadd.f32 0.0, %v604
        %v606 = vpop.f32.mrb[0].mxu0
        %v607 = vpop.f32.mrb[0].mxu0
        %v608 = vpop.f32.mrb[0].mxu0
        %609 = vdwg.mxu0
        %v610 = vxor.u32 %v605, 2147483648
        %v611 = vmul.f32 %v610, 1.442695
        %v612 = vpow.pop %v611
        %v613 = vadd.f32 %v612, 1.0
        %v614 = vrcp.pop %v613
        %v615 = vmul.f32 1.0, %v614
        %v616 = vmul.f32 %v605, %v615
        %v617 = vld [vmem:[#allocation7] sm:$0xf]
        %v618 = vld [vmem:[#allocation7 + $0x4] sm:$0xf]
        %v619 = vld [vmem:[#allocation7 + $0x8] sm:$0xf]
        %v620 = vld [vmem:[#allocation7 + $0xc] sm:$0xf]
        %v625 = vunpack.c.l.b16 %v617
        %v626 = vunpack.c.l.b16 %v618
        %v627 = vunpack.c.l.b16 %v619
        %v628 = vunpack.c.l.b16 %v620
        %v629 = vpack.c.b16 %v626, %v625
        %v630 = vpack.c.b16 %v628, %v627
        %633 = vmatprep.subr.bf16.mxu0 0
        %634 = vmatpush1.bf16.msra.mxu0 %v629
        %635 = vmatprep.subr.bf16.mxu0 0
        %636 = vmatpush1.bf16.msra.mxu0 %v630
        %637 = vmatprep.subr.bf16.mxu0 0
        %638 = vmatpush1.bf16.msra.mxu0 0
        %639 = vmatprep.subr.bf16.mxu0 0
        %640 = vmatpush1.bf16.msra.mxu0 0
        %641 = vmatprep.subr.bf16.mxu0 0
        %642 = vmatpush1.bf16.msra.mxu0 0
        %643 = vmatprep.subr.bf16.mxu0 0
        %644 = vmatpush1.bf16.msra.mxu0 0
        %645 = vmatprep.subr.bf16.mxu0 0
        %646 = vmatpush1.bf16.msra.mxu0 0
        %647 = vmatprep.subr.bf16.mxu0 0
        %648 = vmatpush1.bf16.msra.mxu0 0
        %649 = vmatprep.subr.bf16.mxu0 0
        %650 = vmatpush1.bf16.msra.mxu0 0
        %651 = vmatprep.subr.bf16.mxu0 0
        %652 = vmatpush1.bf16.msra.mxu0 0
        %653 = vmatprep.subr.bf16.mxu0 0
        %654 = vmatpush1.bf16.msra.mxu0 0
        %655 = vmatprep.subr.bf16.mxu0 0
        %656 = vmatpush1.bf16.msra.mxu0 0
        %657 = vmatprep.subr.bf16.mxu0 0
        %658 = vmatpush1.bf16.msra.mxu0 0
        %659 = vmatprep.subr.bf16.mxu0 0
        %660 = vmatpush1.bf16.msra.mxu0 0
        %661 = vmatprep.subr.bf16.mxu0 0
        %662 = vmatpush1.bf16.msra.mxu0 0
        %663 = vmatprep.subr.bf16.mxu0 0
        %664 = vmatpush1.bf16.msra.mxu0 0
        %665 = vmatprep.mubr.bf16.mxu0 0
        %666 = vmatmul.mubr.bf16.gmra.mrb[0].mxu0 %v568
        %v667 = vpop.f32.mrb[0].mxu0
        %v668 = vadd.f32 0.0, %v667
        %v669 = vpop.f32.mrb[0].mxu0
        %v670 = vpop.f32.mrb[0].mxu0
        %v671 = vpop.f32.mrb[0].mxu0
        %672 = vdwg.mxu0
        %v673 = vxor.u32 %v668, 2147483648
        %v674 = vmul.f32 %v673, 1.442695
        %v675 = vpow.pop %v674
        %v676 = vadd.f32 %v675, 1.0
        %v677 = vrcp.pop %v676
        %v678 = vmul.f32 1.0, %v677
        %v679 = vmul.f32 %v668, %v678
        %v680 = vld [vmem:[#allocation8] sm:$0xf]
        %v681 = vld [vmem:[#allocation8 + $0x4] sm:$0xf]
        %v682 = vld [vmem:[#allocation8 + $0x8] sm:$0xf]
        %v683 = vld [vmem:[#allocation8 + $0xc] sm:$0xf]
        %v688 = vunpack.c.l.b16 %v680
        %v689 = vunpack.c.l.b16 %v681
        %v690 = vunpack.c.l.b16 %v682
        %v691 = vunpack.c.l.b16 %v683
        %v692 = vpack.c.b16 %v689, %v688
        %v693 = vpack.c.b16 %v691, %v690
        %696 = vmatprep.subr.bf16.mxu0 0
        %697 = vmatpush1.bf16.msra.mxu0 %v692
        %698 = vmatprep.subr.bf16.mxu0 0
        %699 = vmatpush1.bf16.msra.mxu0 %v693
        %700 = vmatprep.subr.bf16.mxu0 0
        %701 = vmatpush1.bf16.msra.mxu0 0
        %702 = vmatprep.subr.bf16.mxu0 0
        %703 = vmatpush1.bf16.msra.mxu0 0
        %704 = vmatprep.subr.bf16.mxu0 0
        %705 = vmatpush1.bf16.msra.mxu0 0
        %706 = vmatprep.subr.bf16.mxu0 0
        %707 = vmatpush1.bf16.msra.mxu0 0
        %708 = vmatprep.subr.bf16.mxu0 0
        %709 = vmatpush1.bf16.msra.mxu0 0
        %710 = vmatprep.subr.bf16.mxu0 0
        %711 = vmatpush1.bf16.msra.mxu0 0
        %712 = vmatprep.subr.bf16.mxu0 0
        %713 = vmatpush1.bf16.msra.mxu0 0
        %714 = vmatprep.subr.bf16.mxu0 0
        %715 = vmatpush1.bf16.msra.mxu0 0
        %716 = vmatprep.subr.bf16.mxu0 0
        %717 = vmatpush1.bf16.msra.mxu0 0
        %718 = vmatprep.subr.bf16.mxu0 0
        %719 = vmatpush1.bf16.msra.mxu0 0
        %720 = vmatprep.subr.bf16.mxu0 0
        %721 = vmatpush1.bf16.msra.mxu0 0
        %722 = vmatprep.subr.bf16.mxu0 0
        %723 = vmatpush1.bf16.msra.mxu0 0
        %724 = vmatprep.subr.bf16.mxu0 0
        %725 = vmatpush1.bf16.msra.mxu0 0
        %726 = vmatprep.subr.bf16.mxu0 0
        %727 = vmatpush1.bf16.msra.mxu0 0
        %728 = vmatprep.mubr.bf16.mxu0 0
        %729 = vmatmul.mubr.bf16.gmra.mrb[0].mxu0 %v568
        %v730 = vpop.f32.mrb[0].mxu0
        %v731 = vadd.f32 0.0, %v730
        %v732 = vpop.f32.mrb[0].mxu0
        %v733 = vpop.f32.mrb[0].mxu0
        %v734 = vpop.f32.mrb[0].mxu0
        %735 = vdwg.mxu0
        %v736 = vxor.u32 %v731, 2147483648
        %v737 = vmul.f32 %v736, 1.442695
        %v738 = vpow.pop %v737
        %v739 = vadd.f32 %v738, 1.0
        %v740 = vrcp.pop %v739
        %v741 = vmul.f32 1.0, %v740
        %v742 = vmul.f32 %v731, %v741
        %v743 = vld [vmem:[#allocation10] sm:$0x1]
        %v745 = vlaneseq
        %v746 = vshrl.u32 %v745, 7
        %v747 = vsub.s32 0, %v746
        %v748 = vrot.slane %v743, %v747
        %v750 = vmul.f32 %v742, %v748
        %v751 = vld [vmem:[#allocation11] sm:$0x1]
        %v753 = vlaneseq
        %v754 = vshrl.u32 %v753, 7
        %v755 = vsub.s32 0, %v754
        %v756 = vrot.slane %v751, %v755
        %v758 = vadd.f32 %v750, %v756
        %v759 = vmul.f32 %v758, 0.058925565
        %v760 = vld [vmem:[#allocation13] sm:$0x1]
        %v762 = vlaneseq
        %v763 = vshrl.u32 %v762, 7
        %v764 = vsub.s32 0, %v763
        %v765 = vrot.slane %v760, %v764
        %v767 = vmul.f32 %v742, %v765
        %v768 = vld [vmem:[#allocation14] sm:$0x1]
        %v770 = vlaneseq
        %v771 = vshrl.u32 %v770, 7
        %v772 = vsub.s32 0, %v771
        %v773 = vrot.slane %v768, %v772
        %v775 = vadd.f32 %v767, %v773
        %v776 = vpack.c.bf16 %v616, %v616
        %vm777 = vcmask 519168
        %778 = vst.msk [vmem:[%s525] sm:$0xf] %vm777, %v776
        %v779 = vpack.c.bf16 %v679, %v679
        %780 = vst.msk [vmem:[%s532] sm:$0xf] %vm777, %v779
        %v781 = vpack.c.bf16 %v759, %v759
        %vm782 = vcmask 257024
        %783 = vst.msk [vmem:[%s539] sm:$0xf] %vm782, %v781
        %v784 = vpack.c.bf16 %v775, %v775
        %785 = vst.msk [vmem:[%s546] sm:$0xf] %vm782, %v784
        %s786 = sand.u32 %s236, 1
        %s787 = scalar_lea.sflag [#allocation4], %s786
        %s788 = sand.u32 %s236, 1
        %s789 = smul.addr %s788, 4
        %s790 = scalar_lea.vmem [#allocation16], %s789
        %s791 = sand.u32 %s39, 1
        %s792 = scalar_lea.sflag [#allocation18], %s791
        %s793 = sand.u32 %s264, 1
        %s794 = smul.addr %s793, 4
        %s795 = scalar_lea.vmem [#allocation17], %s794
        %s796 = sand.u32 %s39, 1
        %s797 = scalar_lea.sflag [#allocation18], %s796
        %s798 = sand.u32 %s292, 1
        %s799 = smul.addr %s798, 4
        %s800 = scalar_lea.vmem [#allocation19], %s799
        %s801 = sand.u32 %s320, 1
        %s802 = scalar_lea.sflag [#allocation21], %s801
        %s803 = sand.u32 %s320, 1
        %s804 = smul.addr %s803, 4
        %s805 = scalar_lea.vmem [#allocation20], %s804
        // Predicated region
        $region85: #{tpu_custom_call.1} parent=51 // pred_check
          %p806 = pneg %p246
        $region86: #{tpu_custom_call.1} parent=51 // pred_check_branch
          %808 = sbr.rel (%p806) target = $region88
        $region87: #{tpu_custom_call.1} parent=51 // pred_region
          %s810 = ssub.s32 64, 64
          %811 = vsyncadd %s787, %s810
          %s812 = sadd.s32 %s44, %s43
          %s813 = smul.addr %s812, 64
          %s814 = scalar_lea.hbm %s8, %s813
          %s816 = sshll.u32 %s790, 4
          %s817 = int_to_ptr.vmem [resolvable:$true] %s816
          %819 = dma.vmem_to_hbm [thread:$0]  %s817, 64, %s814, %s787
        $region88: #{tpu_custom_call.1} parent=51 // pred_fallthru
          _
        // Predicated region
        $region89: #{tpu_custom_call.1} parent=51 // pred_check
          %p820 = pneg %p274
        $region90: #{tpu_custom_call.1} parent=51 // pred_check_branch
          %822 = sbr.rel (%p820) target = $region92
        $region91: #{tpu_custom_call.1} parent=51 // pred_region
          %s824 = ssub.s32 64, 64
          %825 = vsyncadd %s792, %s824
          %s826 = sadd.s32 %s44, %s43
          %s827 = smul.addr %s826, 64
          %s828 = scalar_lea.hbm %s9, %s827
          %s830 = sshll.u32 %s795, 4
          %s831 = int_to_ptr.vmem [resolvable:$true] %s830
          %833 = dma.vmem_to_hbm [thread:$0]  %s831, 64, %s828, %s792
        $region92: #{tpu_custom_call.1} parent=51 // pred_fallthru
          _
        // Predicated region
        $region93: #{tpu_custom_call.1} parent=51 // pred_check
          %p834 = pneg %p302
        $region94: #{tpu_custom_call.1} parent=51 // pred_check_branch
          %836 = sbr.rel (%p834) target = $region96
        $region95: #{tpu_custom_call.1} parent=51 // pred_region
          %s838 = ssub.s32 64, 64
          %839 = vsyncadd %s797, %s838
          %s840 = sadd.s32 %s44, %s43
          %s841 = smul.addr %s840, 64
          %s842 = scalar_lea.hbm %s10, %s841
          %s844 = sshll.u32 %s800, 4
          %s845 = int_to_ptr.vmem [resolvable:$true] %s844
          %847 = dma.vmem_to_hbm [thread:$0]  %s845, 64, %s842, %s797
        $region96: #{tpu_custom_call.1} parent=51 // pred_fallthru
          _
        // Predicated region
        $region97: #{tpu_custom_call.1} parent=51 // pred_check
          %p848 = pneg %p330
        $region98: #{tpu_custom_call.1} parent=51 // pred_check_branch
          %850 = sbr.rel (%p848) target = $region100
        $region99: #{tpu_custom_call.1} parent=51 // pred_region
          %s852 = ssub.s32 64, 64
          %853 = vsyncadd %s802, %s852
          %s854 = sadd.s32 %s44, %s43
          %s855 = smul.addr %s854, 64
          %s856 = scalar_lea.hbm %s11, %s855
          %s858 = sshll.u32 %s805, 4
          %s859 = int_to_ptr.vmem [resolvable:$true] %s858
          %861 = dma.vmem_to_hbm [thread:$0]  %s859, 64, %s856, %s802
        $region100: #{tpu_custom_call.1} parent=51 // pred_fallthru
          _
      $region52: #{tpu_custom_call.1} parent=5 // pred_fallthru
        _
      %p862 = scmp.le.s32.totalorder 2, %s34
      // Predicated region
      $region101: #{tpu_custom_call.1} parent=5 // pred_check
        %p863 = pneg %p862
      $region102: #{tpu_custom_call.1} parent=5 // pred_check_branch
        %865 = sbr.rel (%p863) target = $region104
      $region103: #{tpu_custom_call.1} parent=5 // pred_region
        %s866 = ssub.s32 %s34, 2
        // Predicated region
        $region105: #{tpu_custom_call.1} parent=103 // pred_check
          %p867 = pneg %p252
        $region106: #{tpu_custom_call.1} parent=103 // pred_check_branch
          %869 = sbr.rel (%p867) target = $region108
        $region107: #{tpu_custom_call.1} parent=103 // pred_region
          %s870 = sand.u32 %s237, 1
          %s871 = scalar_lea.sflag [#allocation4], %s870
          %s872 = sand.u32 %s237, 1
          %s873 = smul.addr %s872, 4
          %s874 = scalar_lea.vmem [#allocation16], %s873
          %875 = dma.done %s871, 64
        $region108: #{tpu_custom_call.1} parent=103 // pred_fallthru
          _
        // Predicated region
        $region109: #{tpu_custom_call.1} parent=103 // pred_check
          %p876 = pneg %p280
        $region110: #{tpu_custom_call.1} parent=103 // pred_check_branch
          %878 = sbr.rel (%p876) target = $region112
        $region111: #{tpu_custom_call.1} parent=103 // pred_region
          %s879 = sand.u32 %s40, 1
          %s880 = scalar_lea.sflag [#allocation18], %s879
          %s881 = sand.u32 %s265, 1
          %s882 = smul.addr %s881, 4
          %s883 = scalar_lea.vmem [#allocation17], %s882
          %884 = dma.done %s880, 64
        $region112: #{tpu_custom_call.1} parent=103 // pred_fallthru
          _
        // Predicated region
        $region113: #{tpu_custom_call.1} parent=103 // pred_check
          %p885 = pneg %p308
        $region114: #{tpu_custom_call.1} parent=103 // pred_check_branch
          %887 = sbr.rel (%p885) target = $region116
        $region115: #{tpu_custom_call.1} parent=103 // pred_region
          %s888 = sand.u32 %s40, 1
          %s889 = scalar_lea.sflag [#allocation18], %s888
          %s890 = sand.u32 %s293, 1
          %s891 = smul.addr %s890, 4
          %s892 = scalar_lea.vmem [#allocation19], %s891
          %893 = dma.done %s889, 64
        $region116: #{tpu_custom_call.1} parent=103 // pred_fallthru
          _
        // Predicated region
        $region117: #{tpu_custom_call.1} parent=103 // pred_check
          %p894 = pneg %p336
        $region118: #{tpu_custom_call.1} parent=103 // pred_check_branch
          %896 = sbr.rel (%p894) target = $region120
        $region119: #{tpu_custom_call.1} parent=103 // pred_region
          %s897 = sand.u32 %s321, 1
          %s898 = scalar_lea.sflag [#allocation21], %s897
          %s899 = sand.u32 %s321, 1
          %s900 = smul.addr %s899, 4
          %s901 = scalar_lea.vmem [#allocation20], %s900
          %902 = dma.done %s898, 64
        $region120: #{tpu_custom_call.1} parent=103 // pred_fallthru
          _
      $region104: #{tpu_custom_call.1} parent=5 // pred_fallthru
        _
    $region6: #{tpu_custom_call.1} parent=1 // loop_footer
      %s38 = sadd.s32 1, %s34
    $region7: #{tpu_custom_call.1} parent=1 // loop_footer_branch
      %33 = sbr.rel target = $region3
    $region8: #{tpu_custom_call.1} parent=1 // loop_exit
      _
    %903 = vsyncpa [#allocation3], 1
    %s904 = scalar_lea.sflag [#allocation3], 1
    %905 = vsyncpa %s904, 1
    %906 = vsyncpa [#allocation6], 1
    %907 = vsyncpa [#allocation9], 1
    %908 = vsyncpa [#allocation12], 1
    %909 = vsyncpa [#allocation15], 1
    %910 = vsyncpa [#allocation4], 1
    %s911 = scalar_lea.sflag [#allocation4], 1
    %912 = vsyncpa %s911, 1
    %913 = vsyncpa [#allocation18], 1
    %s914 = scalar_lea.sflag [#allocation18], 1
    %915 = vsyncpa %s914, 1
    %916 = vsyncpa [#allocation21], 1
    %s917 = scalar_lea.sflag [#allocation21], 1
    %918 = vsyncpa %s917, 1

</llo_original>
